<compile_context>
chip_gen: v5e
topology: v5e:2x2
jax: 0.10.0
libtpu: 0.0.40
codegen_flags: <defaults>
</compile_context>

<pallas_src>
from math import exp
from functools import partial

import jax
import jax.numpy as jnp
from jax.experimental import pallas as pl
from jax.experimental.pallas import tpu as pltpu

WINDOW_SIZE = 11
SIGMA = 1.5
C1 = 0.01 ** 2
C2 = 0.03 ** 2


def gaussian_1d(window_size: int, sigma: float) -> jnp.ndarray:
    vals = jnp.array(
        [exp(-((x - window_size // 2) ** 2) / float(2 * sigma ** 2))
         for x in range(window_size)],
        dtype=jnp.float32)
    return vals / vals.sum()


def _blur_matrix(n: int, k: int, w1d: jnp.ndarray) -> jnp.ndarray:
    """(n, n) truncated band matrix M with M[i, r] = w1d[r - i + k//2].

    Left-multiplying an image block by M equals the 1-D Gaussian filtering
    with zero padding of k//2 (padding folded into the truncated band)."""
    p = k // 2
    i = jnp.arange(n)[:, None]
    r = jnp.arange(n)[None, :]
    off = r - i + p
    return jnp.where((off >= 0) & (off < k),
                     w1d[jnp.clip(off, 0, k - 1)], 0.0).astype(jnp.float32)


def _pick_group(n: int, w: int) -> int:
    """Slices per grid step: prefer a lane width that is a multiple of 128
    (unmasked stores, full VPU lanes) and bounded in size; else take all."""
    best = None
    for d in range(1, n + 1):
        if n % d == 0 and (d * w) % 128 == 0 and d * w <= 1024:
            best = d
    return best if best is not None else n


def ssim_kernel(x1_ref, x2_ref, atd_ref, bmd_ref, out_ref, acc_ref, *,
                inv_count):
    step = pl.program_id(0)

    @pl.when(step == 0)
    def _init():
        acc_ref[...] = jnp.zeros_like(acc_ref)

    H = x1_ref.shape[0]
    x1 = x1_ref[...]                       # (H, G*W)
    x2 = x2_ref[...]                       # (H, G*W)

    # Five blur operands stacked along sublanes -> two lane-dense MXU matmuls.
    ops = jnp.concatenate([x1, x2, x1 * x1, x2 * x2, x1 * x2], axis=0)  # (5H, GW)
    t = jnp.dot(atd_ref[...], ops, preferred_element_type=jnp.float32)  # vertical
    r = jnp.dot(t, bmd_ref[...], preferred_element_type=jnp.float32)    # horizontal

    mu1 = r[0 * H:1 * H]
    mu2 = r[1 * H:2 * H]
    mu1_sq = mu1 * mu1
    mu2_sq = mu2 * mu2
    mu1_mu2 = mu1 * mu2
    sigma1_sq = r[2 * H:3 * H] - mu1_sq
    sigma2_sq = r[3 * H:4 * H] - mu2_sq
    sigma12 = r[4 * H:5 * H] - mu1_mu2

    ssim_map = ((2.0 * mu1_mu2 + C1) * (2.0 * sigma12 + C2)) / (
        (mu1_sq + mu2_sq + C1) * (sigma1_sq + sigma2_sq + C2))

    # Lane-dense vector accumulator; defer the cross-lane reduce to the epilogue.
    acc_ref[...] += ssim_map

    @pl.when(step == pl.num_programs(0) - 1)
    def _finalize():
        # SsimLoss.forward returns -ssim (size_average=True -> global mean).
        out_ref[0, 0] = -(jnp.sum(acc_ref[...]) * inv_count)


@jax.jit
def ssim_loss(img1, img2):
    B, C, H, W = img1.shape
    N = B * C
    k = WINDOW_SIZE
    G = _pick_group(N, W)
    steps = N // G
    gw = G * W

    w1d = gaussian_1d(k, SIGMA)
    at = _blur_matrix(H, k, w1d)          # (H, H)  vertical pass (left-mult)
    bm = _blur_matrix(W, k, w1d).T        # (W, W)  horizontal pass (right-mult)
    atd = jnp.kron(jnp.eye(5, dtype=jnp.float32), at)   # (5H, 5H) block-diag
    bmd = jnp.kron(jnp.eye(G, dtype=jnp.float32), bm)   # (GW, GW) block-diag

    # (B, C, H, W) -> (H, N*W): slices laid out along lanes, no padding.
    def to_lane_major(x):
        return (x.astype(jnp.float32).reshape(N, H, W)
                .transpose(1, 0, 2).reshape(H, N * W))

    x1 = to_lane_major(img1)
    x2 = to_lane_major(img2)

    inv_count = 1.0 / float(B * C * H * W)
    kernel = partial(ssim_kernel, inv_count=inv_count)

    out = pl.pallas_call(
        kernel,
        out_shape=jax.ShapeDtypeStruct((1, 1), jnp.float32),
        grid_spec=pltpu.PrefetchScalarGridSpec(
            num_scalar_prefetch=0,
            grid=(steps,),
            in_specs=[
                pl.BlockSpec((H, gw), lambda i: (0, i)),
                pl.BlockSpec((H, gw), lambda i: (0, i)),
                pl.BlockSpec((5 * H, 5 * H), lambda i: (0, 0)),
                pl.BlockSpec((gw, gw), lambda i: (0, 0)),
            ],
            out_specs=pl.BlockSpec((1, 1), lambda i: (0, 0),
                                   memory_space=pltpu.MemorySpace.SMEM),
            scratch_shapes=[pltpu.VMEM((H, gw), jnp.float32)],
        ),
        compiler_params=pltpu.CompilerParams(
            dimension_semantics=("arbitrary",)),
    )(x1, x2, atd, bmd)
    return out[0, 0]


def ssim_loss_ref(img1, img2):
    """Pure-JAX reference mirroring the PyTorch module (depthwise conv2d)."""
    B, C, H, W = img1.shape
    k = WINDOW_SIZE
    w1d = gaussian_1d(k, SIGMA)
    w2d = jnp.outer(w1d, w1d)
    window = jnp.broadcast_to(w2d[None, None], (C, 1, k, k)).astype(jnp.float32)

    def conv(x):
        return jax.lax.conv_general_dilated(
            x.astype(jnp.float32), window, window_strides=(1, 1),
            padding=[(k // 2, k // 2), (k // 2, k // 2)],
            dimension_numbers=("NCHW", "OIHW", "NCHW"),
            feature_group_count=C)

    mu1 = conv(img1)
    mu2 = conv(img2)
    mu1_sq = mu1 ** 2
    mu2_sq = mu2 ** 2
    mu1_mu2 = mu1 * mu2
    sigma1_sq = conv(img1 * img1) - mu1_sq
    sigma2_sq = conv(img2 * img2) - mu2_sq
    sigma12 = conv(img1 * img2) - mu1_mu2
    ssim_map = ((2 * mu1_mu2 + C1) * (2 * sigma12 + C2)) / (
        (mu1_sq + mu2_sq + C1) * (sigma1_sq + sigma2_sq + C2))
    return -jnp.mean(ssim_map)


if __name__ == "__main__":
    key = jax.random.PRNGKey(0)
    k1, k2 = jax.random.split(key)
    B, C, H, W = 2, 4, 16, 16
    img1 = jax.random.uniform(k1, (B, C, H, W), dtype=jnp.float32)
    img2 = jnp.clip(img1 + 0.1 * jax.random.normal(k2, (B, C, H, W),
                                                   dtype=jnp.float32), 0.0, 1.0)

    out = ssim_loss(img1, img2)
    jax.block_until_ready(out)

    ref = ssim_loss_ref(img1, img2)
    assert jnp.allclose(out, ref, rtol=1e-3, atol=1e-4), (out, ref)
    print("KERNEL_OK")
</pallas_src>

<mosaic_0001>
module attributes {stable_mosaic.version = 11 : i64} {
  func.func @ssim_kernel(%arg0: i32, %arg1: memref<16x128xf32, #tpu.memory_space<vmem>>, %arg2: memref<16x128xf32, #tpu.memory_space<vmem>>, %arg3: memref<80x80xf32, #tpu.memory_space<vmem>>, %arg4: memref<128x128xf32, #tpu.memory_space<vmem>>, %arg5: memref<1x1xf32, #tpu.memory_space<smem>>, %arg6: memref<16x128xf32, #tpu.memory_space<vmem>>) attributes {dimension_semantics = [#tpu.dimension_semantics<arbitrary>], iteration_bounds = array<i64: 1>, scalar_prefetch = 0 : i64, scratch_operands = 1 : i64, tpu.core_type = #tpu.core_type<tc>, window_params = [{transform_indices = @transform_0, window_bounds = array<i64: 16, 128>}, {transform_indices = @transform_1, window_bounds = array<i64: 16, 128>}, {pipeline_mode = #tpu.pipeline_mode<synchronous>, transform_indices = @transform_2, window_bounds = array<i64: 80, 80>}, {pipeline_mode = #tpu.pipeline_mode<synchronous>, transform_indices = @transform_3, window_bounds = array<i64: 128, 128>}, {transform_indices = @transform_4, window_bounds = array<i64: 1, 1>}]} {
    %c0_i32 = arith.constant 0 : i32
    %0 = arith.cmpi eq, %arg0, %c0_i32 : i32
    %1 = arith.extui %0 : i1 to i32
    %c0_i32_0 = arith.constant 0 : i32
    %2 = arith.cmpi ne, %1, %c0_i32_0 : i32
    scf.if %2 {
      %cst_21 = arith.constant 0.000000e+00 : f32
      %47 = vector.broadcast %cst_21 : f32 to vector<16x128xf32>
      %c0_22 = arith.constant 0 : index
      %c0_23 = arith.constant 0 : index
      %48 = vector.load %arg6[%c0_22, %c0_23] : memref<16x128xf32, #tpu.memory_space<vmem>>, vector<16x128xf32>
      tpu.vector_store %arg6[%c0_22, %c0_23], %47 {strides = array<i32>} : memref<16x128xf32, #tpu.memory_space<vmem>>, vector<16x128xf32>,
    } else {
    }
    %c0 = arith.constant 0 : index
    %c0_1 = arith.constant 0 : index
    %3 = vector.load %arg1[%c0, %c0_1] : memref<16x128xf32, #tpu.memory_space<vmem>>, vector<16x128xf32>
    %c0_2 = arith.constant 0 : index
    %c0_3 = arith.constant 0 : index
    %4 = vector.load %arg2[%c0_2, %c0_3] : memref<16x128xf32, #tpu.memory_space<vmem>>, vector<16x128xf32>
    %5 = arith.mulf %3, %3 : vector<16x128xf32>
    %6 = arith.mulf %4, %4 : vector<16x128xf32>
    %7 = arith.mulf %3, %4 : vector<16x128xf32>
    %8 = tpu.concatenate %3, %4, %5, %6, %7 in 0 : vector<16x128xf32>, vector<16x128xf32>, vector<16x128xf32>, vector<16x128xf32>, vector<16x128xf32> -> vector<80x128xf32>
    %c0_4 = arith.constant 0 : index
    %c0_5 = arith.constant 0 : index
    %9 = vector.load %arg3[%c0_4, %c0_5] : memref<80x80xf32, #tpu.memory_space<vmem>>, vector<80x80xf32>
    %cst = arith.constant dense<0.000000e+00> : vector<80x128xf32>
    %10 = tpu.matmul %9, %8, %cst {dimension_numbers = #tpu.dot_dimension_numbers<[1], [0], [0], [1], [0, 0, 1, 1], [], []>} : vector<80x80xf32>, vector<80x128xf32>, vector<80x128xf32> -> vector<80x128xf32>
    %c0_6 = arith.constant 0 : index
    %c0_7 = arith.constant 0 : index
    %11 = vector.load %arg4[%c0_6, %c0_7] : memref<128x128xf32, #tpu.memory_space<vmem>>, vector<128x128xf32>
    %cst_8 = arith.constant dense<0.000000e+00> : vector<80x128xf32>
    %12 = tpu.matmul %10, %11, %cst_8 {dimension_numbers = #tpu.dot_dimension_numbers<[1], [0], [0], [1], [0, 0, 1, 1], [], []>} : vector<80x128xf32>, vector<128x128xf32>, vector<80x128xf32> -> vector<80x128xf32>
    %13 = vector.extract_strided_slice %12 {offsets = [0, 0], sizes = [16, 128], strides = [1, 1]} : vector<80x128xf32> to vector<16x128xf32>
    %14 = vector.extract_strided_slice %12 {offsets = [16, 0], sizes = [16, 128], strides = [1, 1]} : vector<80x128xf32> to vector<16x128xf32>
    %15 = arith.mulf %13, %13 : vector<16x128xf32>
    %16 = arith.mulf %14, %14 : vector<16x128xf32>
    %17 = arith.mulf %13, %14 : vector<16x128xf32>
    %18 = vector.extract_strided_slice %12 {offsets = [32, 0], sizes = [16, 128], strides = [1, 1]} : vector<80x128xf32> to vector<16x128xf32>
    %19 = arith.subf %18, %15 : vector<16x128xf32>
    %20 = vector.extract_strided_slice %12 {offsets = [48, 0], sizes = [16, 128], strides = [1, 1]} : vector<80x128xf32> to vector<16x128xf32>
    %21 = arith.subf %20, %16 : vector<16x128xf32>
    %22 = vector.extract_strided_slice %12 {offsets = [64, 0], sizes = [16, 128], strides = [1, 1]} : vector<80x128xf32> to vector<16x128xf32>
    %23 = arith.subf %22, %17 : vector<16x128xf32>
    %cst_9 = arith.constant 2.000000e+00 : f32
    %24 = vector.broadcast %cst_9 : f32 to vector<16x128xf32>
    %25 = arith.mulf %24, %17 : vector<16x128xf32>
    %cst_10 = arith.constant 9.99999974E-5 : f32
    %26 = vector.broadcast %cst_10 : f32 to vector<16x128xf32>
    %27 = arith.addf %25, %26 : vector<16x128xf32>
    %cst_11 = arith.constant 2.000000e+00 : f32
    %28 = vector.broadcast %cst_11 : f32 to vector<16x128xf32>
    %29 = arith.mulf %28, %23 : vector<16x128xf32>
    %cst_12 = arith.constant 8.99999984E-4 : f32
    %30 = vector.broadcast %cst_12 : f32 to vector<16x128xf32>
    %31 = arith.addf %29, %30 : vector<16x128xf32>
    %32 = arith.mulf %27, %31 : vector<16x128xf32>
    %33 = arith.addf %15, %16 : vector<16x128xf32>
    %cst_13 = arith.constant 9.99999974E-5 : f32
    %34 = vector.broadcast %cst_13 : f32 to vector<16x128xf32>
    %35 = arith.addf %33, %34 : vector<16x128xf32>
    %36 = arith.addf %19, %21 : vector<16x128xf32>
    %cst_14 = arith.constant 8.99999984E-4 : f32
    %37 = vector.broadcast %cst_14 : f32 to vector<16x128xf32>
    %38 = arith.addf %36, %37 : vector<16x128xf32>
    %39 = arith.mulf %35, %38 : vector<16x128xf32>
    %40 = arith.divf %32, %39 : vector<16x128xf32>
    %c0_15 = arith.constant 0 : index
    %c0_16 = arith.constant 0 : index
    %41 = vector.load %arg6[%c0_15, %c0_16] : memref<16x128xf32, #tpu.memory_space<vmem>>, vector<16x128xf32>
    %42 = arith.addf %41, %40 : vector<16x128xf32>
    %c0_17 = arith.constant 0 : index
    %c0_18 = arith.constant 0 : index
    %43 = vector.load %arg6[%c0_17, %c0_18] : memref<16x128xf32, #tpu.memory_space<vmem>>, vector<16x128xf32>
    tpu.vector_store %arg6[%c0_17, %c0_18], %42 {strides = array<i32>} : memref<16x128xf32, #tpu.memory_space<vmem>>, vector<16x128xf32>,
    %c0_i32_19 = arith.constant 0 : i32
    %44 = arith.cmpi eq, %arg0, %c0_i32_19 : i32
    %45 = arith.extui %44 : i1 to i32
    %c0_i32_20 = arith.constant 0 : i32
    %46 = arith.cmpi ne, %45, %c0_i32_20 : i32
    scf.if %46 {
      %c0_21 = arith.constant 0 : index
      %c0_22 = arith.constant 0 : index
      %47 = vector.load %arg6[%c0_21, %c0_22] : memref<16x128xf32, #tpu.memory_space<vmem>>, vector<16x128xf32>
      %48 = vector.shape_cast %47 : vector<16x128xf32> to vector<1x16x128xf32>
      %cst_23 = arith.constant dense<0.000000e+00> : vector<1xf32>
      %49 = vector.multi_reduction <add>, %48, %cst_23 [1, 2] : vector<1x16x128xf32> to vector<1xf32>
      %50 = vector.shape_cast %49 : vector<1xf32> to vector<1x1x1xf32>
      %51 = vector.extract %50[0, 0, 0] : f32 from vector<1x1x1xf32>
      %cst_24 = arith.constant 4.8828125E-4 : f32
      %52 = arith.mulf %51, %cst_24 : f32
      %cst_25 = arith.constant 0.000000e+00 : f32
      %53 = arith.subf %cst_25, %52 : f32
      %c0_26 = arith.constant 0 : index
      %c0_27 = arith.constant 0 : index
      %54 = memref.load %arg5[%c0_26, %c0_27] : memref<1x1xf32, #tpu.memory_space<smem>>
      memref.store %53, %arg5[%c0_26, %c0_27] : memref<1x1xf32, #tpu.memory_space<smem>>
    } else {
    }
    return
  }
  func.func @transform_0(%arg0: i32) -> (i32, i32) {
    %c0_i32 = arith.constant 0 : i32
    %c0_i32_0 = arith.constant 0 : i32
    return %c0_i32, %arg0 : i32, i32
  }
  func.func @transform_1(%arg0: i32) -> (i32, i32) {
    %c0_i32 = arith.constant 0 : i32
    %c0_i32_0 = arith.constant 0 : i32
    return %c0_i32, %arg0 : i32, i32
  }
  func.func @transform_2(%arg0: i32) -> (i32, i32) {
    %c0_i32 = arith.constant 0 : i32
    %c0_i32_0 = arith.constant 0 : i32
    %c0_i32_1 = arith.constant 0 : i32
    return %c0_i32, %c0_i32_0 : i32, i32
  }
  func.func @transform_3(%arg0: i32) -> (i32, i32) {
    %c0_i32 = arith.constant 0 : i32
    %c0_i32_0 = arith.constant 0 : i32
    %c0_i32_1 = arith.constant 0 : i32
    return %c0_i32, %c0_i32_0 : i32, i32
  }
  func.func @transform_4(%arg0: i32) -> (i32, i32) {
    %c0_i32 = arith.constant 0 : i32
    %c0_i32_0 = arith.constant 0 : i32
    %c0_i32_1 = arith.constant 0 : i32
    return %c0_i32, %c0_i32_0 : i32, i32
  }
}

</mosaic_0001>

<llo_original>
// kernel: ssim_loss.1
$region0: #{ssim_loss.1}
  #allocation0 [shape = 'u32[]', space=smem, size = 0x4, offset = 0x4, fixed_abs, tag = 'smem constant byte address 0x4 - core index']
  #allocation1 [shape = 'u32[72,128]{1,0:T(1,128)}', space=vmem, size = 0x9000, scoped, tag = 'internal scratch']
  #allocation2 [shape = 'f32[16,128]{1,0:T(8,128)}', space=vmem, size = 0x2000, scoped, tag = 'scratch operand']
  %s0 = inlined_call_operand.vmem [shape: f32[16,128], index: 0, kind: input, shape index: {}]
  %s1 = inlined_call_operand.vmem [shape: f32[16,128], index: 1, kind: input, shape index: {}]
  %s2 = inlined_call_operand.vmem [shape: f32[80,80], index: 2, kind: input, shape index: {}]
  %s3 = inlined_call_operand.vmem [shape: f32[128,128], index: 3, kind: input, shape index: {}]
  %s4 = inlined_call_operand.hbm [shape: f32[1,1], index: 4, kind: output, shape index: {}]
  %s5 = sld [smem:[#allocation0]]
  $region34: #{ssim_loss.1} parent=0
    _
  %s7 = ssub.s32 1, %s5
  %s8 = scalar_select 0, %s7, %s5
  $region1: #{ssim_loss.1} parent=0
    #allocation3 [shape = 'u8[512]{0}', space=smem, size = 0x200, scoped, tag = 'output window, operand 0, single buffered']
    #allocation4 [shape = 's32[1]{0}', space=sflag, size = 0x4, scoped, tag = 'scoped memory for ssim_loss.1']
    %9 = vsyncpa [#allocation4], 0
    // Predicated region
    $region2: #{ssim_loss.1} parent=1 // pred_check
      _
    $region3: #{ssim_loss.1} parent=1 // pred_check_branch
      %11 = sbr.rel (0) target = $region5
    $region4: #{ssim_loss.1} parent=1 // pred_region
      _
    $region5: #{ssim_loss.1} parent=1 // pred_fallthru
      _
    // Predicated region
    $region6: #{ssim_loss.1} parent=1 // pred_check
      _
    $region7: #{ssim_loss.1} parent=1 // pred_check_branch
      %13 = sbr.rel (0) target = $region9
    $region8: #{ssim_loss.1} parent=1 // pred_region
      _
    $region9: #{ssim_loss.1} parent=1 // pred_fallthru
      _
    // Predicated region
    $region10: #{ssim_loss.1} parent=1 // pred_check
      _
    $region11: #{ssim_loss.1} parent=1 // pred_check_branch
      %15 = sbr.rel (0) target = $region13
    $region12: #{ssim_loss.1} parent=1 // pred_region
      _
    $region13: #{ssim_loss.1} parent=1 // pred_fallthru
      _
    // Predicated region
    $region14: #{ssim_loss.1} parent=1 // pred_check
      _
    $region15: #{ssim_loss.1} parent=1 // pred_check_branch
      %17 = sbr.rel (0) target = $region17
    $region16: #{ssim_loss.1} parent=1 // pred_region
      _
    $region17: #{ssim_loss.1} parent=1 // pred_fallthru
      _
    %p18 = scmp.eq.s32.totalorder 0, 0
    // Predicated region
    $region18: #{ssim_loss.1} parent=1 // pred_check
      %p19 = pneg %p18
    $region19: #{ssim_loss.1} parent=1 // pred_check_branch
      %21 = sbr.rel (%p19) target = $region21
    $region20: #{ssim_loss.1} parent=1 // pred_region
      %22 = vst [vmem:[#allocation2] sm:$0xff] 0.0
      %23 = vst [vmem:[#allocation2 + $0x8] sm:$0xff] 0.0
    $region21: #{ssim_loss.1} parent=1 // pred_fallthru
      _
    %v24 = vld [vmem:[%s0] sm:$0xff]
    %v25 = vld [vmem:[%s0 + $0x8] sm:$0xff]
    %v26 = vld [vmem:[%s1] sm:$0xff]
    %v27 = vld [vmem:[%s1 + $0x8] sm:$0xff]
    %v28 = vmul.f32 %v24, %v24
    %v29 = vmul.f32 %v25, %v25
    %v30 = vmul.f32 %v26, %v26
    %v31 = vmul.f32 %v27, %v27
    %v32 = vmul.f32 %v24, %v26
    %v33 = vmul.f32 %v25, %v27
    %v34 = vld [vmem:[%s2] sm:$0xff]
    %v35 = vld [vmem:[%s2 + $0x8] sm:$0xff]
    %v36 = vld [vmem:[%s2 + $0x10] sm:$0xff]
    %v37 = vld [vmem:[%s2 + $0x18] sm:$0xff]
    %v38 = vld [vmem:[%s2 + $0x20] sm:$0xff]
    %v39 = vld [vmem:[%s2 + $0x28] sm:$0xff]
    %v40 = vld [vmem:[%s2 + $0x30] sm:$0xff]
    %v41 = vld [vmem:[%s2 + $0x38] sm:$0xff]
    %v42 = vld [vmem:[%s2 + $0x40] sm:$0xff]
    %v43 = vld [vmem:[%s2 + $0x48] sm:$0xff]
    %vm44 = vcmask 654336
    %v46 = vsel %vm44, %v34, 0
    %v49 = vsel %vm44, %v35, 0
    %v52 = vsel %vm44, %v36, 0
    %v55 = vsel %vm44, %v37, 0
    %v58 = vsel %vm44, %v38, 0
    %v61 = vsel %vm44, %v39, 0
    %v64 = vsel %vm44, %v40, 0
    %v67 = vsel %vm44, %v41, 0
    %v70 = vsel %vm44, %v42, 0
    %v73 = vsel %vm44, %v43, 0
    %75 = vmatpush.msra.mxu0 0.0
    %76 = vmatpush.msra.mxu0 0.0
    %77 = vmatpush.msra.mxu0 0.0
    %78 = vmatpush.msra.mxu0 0.0
    %79 = vmatpush.msra.mxu0 0.0
    %80 = vmatpush.msra.mxu0 0.0
    %81 = vmatpush.msra.mxu0 %v33
    %82 = vmatpush.msra.mxu0 %v32
    %83 = vmatpush.msra.mxu0 %v31
    %84 = vmatpush.msra.mxu0 %v30
    %85 = vmatpush.msra.mxu0 %v29
    %86 = vmatpush.msra.mxu0 %v28
    %87 = vmatpush.msra.mxu0 %v27
    %88 = vmatpush.msra.mxu0 %v26
    %89 = vmatpush.msra.mxu0 %v25
    %90 = vmatpush.msra.mxu0 %v24
    %91 = vmatmul.f32.gmra.mxu0 %v46
    %v92 = vpop.f32.mrf.mxu0
    %v93 = vadd.f32 0.0, %v92
    %94 = vmatmul.f32.gmra.mxu0 %v49
    %v95 = vpop.f32.mrf.mxu0
    %v96 = vadd.f32 0.0, %v95
    %97 = vmatmul.f32.gmra.mxu0 %v52
    %v98 = vpop.f32.mrf.mxu0
    %v99 = vadd.f32 0.0, %v98
    %100 = vmatmul.f32.gmra.mxu0 %v55
    %v101 = vpop.f32.mrf.mxu0
    %v102 = vadd.f32 0.0, %v101
    %103 = vmatmul.f32.gmra.mxu0 %v58
    %v104 = vpop.f32.mrf.mxu0
    %v105 = vadd.f32 0.0, %v104
    %106 = vmatmul.f32.gmra.mxu0 %v61
    %v107 = vpop.f32.mrf.mxu0
    %v108 = vadd.f32 0.0, %v107
    %109 = vmatmul.f32.gmra.mxu0 %v64
    %v110 = vpop.f32.mrf.mxu0
    %v111 = vadd.f32 0.0, %v110
    %112 = vmatmul.f32.gmra.mxu0 %v67
    %v113 = vpop.f32.mrf.mxu0
    %v114 = vadd.f32 0.0, %v113
    %115 = vmatmul.f32.gmra.mxu0 %v70
    %v116 = vpop.f32.mrf.mxu0
    %v117 = vadd.f32 0.0, %v116
    %118 = vmatmul.f32.gmra.mxu0 %v73
    %v119 = vpop.f32.mrf.mxu0
    %v120 = vadd.f32 0.0, %v119
    %121 = vdwg.mxu0
    %v122 = vld [vmem:[%s3] sm:$0xff]
    %v123 = vld [vmem:[%s3 + $0x8] sm:$0xff]
    %v124 = vld [vmem:[%s3 + $0x10] sm:$0xff]
    %v125 = vld [vmem:[%s3 + $0x18] sm:$0xff]
    %v126 = vld [vmem:[%s3 + $0x20] sm:$0xff]
    %v127 = vld [vmem:[%s3 + $0x28] sm:$0xff]
    %v128 = vld [vmem:[%s3 + $0x30] sm:$0xff]
    %v129 = vld [vmem:[%s3 + $0x38] sm:$0xff]
    %v130 = vld [vmem:[%s3 + $0x40] sm:$0xff]
    %v131 = vld [vmem:[%s3 + $0x48] sm:$0xff]
    %v132 = vld [vmem:[%s3 + $0x50] sm:$0xff]
    %v133 = vld [vmem:[%s3 + $0x58] sm:$0xff]
    %v134 = vld [vmem:[%s3 + $0x60] sm:$0xff]
    %v135 = vld [vmem:[%s3 + $0x68] sm:$0xff]
    %v136 = vld [vmem:[%s3 + $0x70] sm:$0xff]
    %v137 = vld [vmem:[%s3 + $0x78] sm:$0xff]
    %138 = vmatpush.msra.mxu0 %v137
    %139 = vmatpush.msra.mxu0 %v136
    %140 = vmatpush.msra.mxu0 %v135
    %141 = vmatpush.msra.mxu0 %v134
    %142 = vmatpush.msra.mxu0 %v133
    %143 = vmatpush.msra.mxu0 %v132
    %144 = vmatpush.msra.mxu0 %v131
    %145 = vmatpush.msra.mxu0 %v130
    %146 = vmatpush.msra.mxu0 %v129
    %147 = vmatpush.msra.mxu0 %v128
    %148 = vmatpush.msra.mxu0 %v127
    %149 = vmatpush.msra.mxu0 %v126
    %150 = vmatpush.msra.mxu0 %v125
    %151 = vmatpush.msra.mxu0 %v124
    %152 = vmatpush.msra.mxu0 %v123
    %153 = vmatpush.msra.mxu0 %v122
    %154 = vmatmul.f32.gmra.mxu0 %v93
    %v155 = vpop.f32.mrf.mxu0
    %v156 = vadd.f32 0.0, %v155
    %157 = vmatmul.f32.gmra.mxu0 %v96
    %v158 = vpop.f32.mrf.mxu0
    %v159 = vadd.f32 0.0, %v158
    %160 = vmatmul.f32.gmra.mxu0 %v99
    %v161 = vpop.f32.mrf.mxu0
    %v162 = vadd.f32 0.0, %v161
    %163 = vmatmul.f32.gmra.mxu0 %v102
    %v164 = vpop.f32.mrf.mxu0
    %v165 = vadd.f32 0.0, %v164
    %166 = vmatmul.f32.gmra.mxu0 %v105
    %v167 = vpop.f32.mrf.mxu0
    %v168 = vadd.f32 0.0, %v167
    %169 = vmatmul.f32.gmra.mxu0 %v108
    %v170 = vpop.f32.mrf.mxu0
    %v171 = vadd.f32 0.0, %v170
    %172 = vmatmul.f32.gmra.mxu0 %v111
    %v173 = vpop.f32.mrf.mxu0
    %v174 = vadd.f32 0.0, %v173
    %175 = vmatmul.f32.gmra.mxu0 %v114
    %v176 = vpop.f32.mrf.mxu0
    %v177 = vadd.f32 0.0, %v176
    %178 = vmatmul.f32.gmra.mxu0 %v117
    %v179 = vpop.f32.mrf.mxu0
    %v180 = vadd.f32 0.0, %v179
    %181 = vmatmul.f32.gmra.mxu0 %v120
    %v182 = vpop.f32.mrf.mxu0
    %v183 = vadd.f32 0.0, %v182
    %184 = vdwg.mxu0
    %v185 = vmul.f32 %v156, %v156
    %v186 = vmul.f32 %v159, %v159
    %v187 = vmul.f32 %v162, %v162
    %v188 = vmul.f32 %v165, %v165
    %v189 = vmul.f32 %v156, %v162
    %v190 = vmul.f32 %v159, %v165
    %v191 = vsub.f32 %v168, %v185
    %v192 = vsub.f32 %v171, %v186
    %v193 = vsub.f32 %v174, %v187
    %v194 = vsub.f32 %v177, %v188
    %v195 = vsub.f32 %v180, %v189
    %v196 = vsub.f32 %v183, %v190
    %v197 = vmul.f32 %v189, 2.0
    %v198 = vmul.f32 %v190, 2.0
    %v199 = vadd.f32 %v197, 0.0001
    %v200 = vadd.f32 %v198, 0.0001
    %v201 = vmul.f32 %v195, 2.0
    %v202 = vmul.f32 %v196, 2.0
    %v203 = vadd.f32 %v201, 0.0009
    %v204 = vadd.f32 %v202, 0.0009
    %v205 = vmul.f32 %v199, %v203
    %v206 = vmul.f32 %v200, %v204
    %v207 = vadd.f32 %v185, %v187
    %v208 = vadd.f32 %v186, %v188
    %v209 = vadd.f32 %v207, 0.0001
    %v210 = vadd.f32 %v208, 0.0001
    %v211 = vadd.f32 %v191, %v193
    %v212 = vadd.f32 %v192, %v194
    %v213 = vadd.f32 %v211, 0.0009
    %v214 = vadd.f32 %v212, 0.0009
    %v215 = vmul.f32 %v209, %v213
    %v216 = vmul.f32 %v210, %v214
    %v217 = vrcp.pop %v215
    %v218 = vmul.f32 %v215, %v217
    %v219 = vsub.f32 1.0, %v218
    %v220 = vmul.f32 %v217, %v219
    %v221 = vadd.f32 %v217, %v220
    %vm222 = vweird.f32 %v215
    %vm223 = vweird.f32 %v217
    %vm224 = vmor %vm222, %vm223
    %v225 = vsel %vm224, %v217, %v221
    %v226 = vand.u32 2147483647, %v215
    %vm227 = vcmp.eq.f32.partialorder %v226, 8.507059e+37
    %v228 = vand.u32 %v215, 2147483648
    %v229 = vor.u32 1.1754944e-38, %v228
    %v230 = vsel %vm227, %v229, %v225
    %v231 = vmul.f32 %v205, %v230
    %v232 = vrcp.pop %v216
    %v233 = vmul.f32 %v216, %v232
    %v234 = vsub.f32 1.0, %v233
    %v235 = vmul.f32 %v232, %v234
    %v236 = vadd.f32 %v232, %v235
    %vm237 = vweird.f32 %v216
    %vm238 = vweird.f32 %v232
    %vm239 = vmor %vm237, %vm238
    %v240 = vsel %vm239, %v232, %v236
    %v241 = vand.u32 2147483647, %v216
    %vm242 = vcmp.eq.f32.partialorder %v241, 8.507059e+37
    %v243 = vand.u32 %v216, 2147483648
    %v244 = vor.u32 1.1754944e-38, %v243
    %v245 = vsel %vm242, %v244, %v240
    %v246 = vmul.f32 %v206, %v245
    %v247 = vld [vmem:[#allocation2] sm:$0xff]
    %v248 = vld [vmem:[#allocation2 + $0x8] sm:$0xff]
    %v249 = vadd.f32 %v247, %v231
    %v250 = vadd.f32 %v248, %v246
    %251 = vst [vmem:[#allocation2] sm:$0xff] %v249
    %252 = vst [vmem:[#allocation2 + $0x8] sm:$0xff] %v250
    // Predicated region
    $region22: #{ssim_loss.1} parent=1 // pred_check
      %p253 = pneg %p18
    $region23: #{ssim_loss.1} parent=1 // pred_check_branch
      %255 = sbr.rel (%p253) target = $region25
    $region24: #{ssim_loss.1} parent=1 // pred_region
      %v256 = vld [vmem:[#allocation2] sm:$0xff]
      %v257 = vld [vmem:[#allocation2 + $0x8] sm:$0xff]
      %v258 = vadd.f32 %v256, %v257
      %259 = vadd.xlane.f32.xlu0 %v258
      %v260 = vpop.xlane.xlu0 %259
      %v261 = vrot.slane %v260, 4
      %v262 = vadd.f32 %v260, %v261
      %v263 = vrot.slane %v262, 2
      %v264 = vadd.f32 %v262, %v263
      %v265 = vrot.slane %v264, 1
      %v266 = vadd.f32 %v264, %v265
      %s267 = vtos %v266
      %s268 = smul.f32 %s267, 0.00048828125
      %s269 = ssub.f32 0.0, %s268
      %s270 = scalar_lea.smem [#allocation3], 0
      %271 = sst [smem:[%s270]] %s269
    $region25: #{ssim_loss.1} parent=1 // pred_fallthru
      _
    // Predicated region
    $region26: #{ssim_loss.1} parent=1 // pred_check
      _
    $region27: #{ssim_loss.1} parent=1 // pred_check_branch
      %273 = sbr.rel (0) target = $region29
    $region28: #{ssim_loss.1} parent=1 // pred_region
      %275 = vsyncadd [#allocation4], 0
      %s277 = sshll.u32 %s4, 4
      %s278 = int_to_ptr.hbm [resolvable:$true] %s277
      %280 = dma.smem_to_hbm [#allocation3], 16, %s278, [#allocation4]
    $region29: #{ssim_loss.1} parent=1 // pred_fallthru
      _
    // Predicated region
    $region30: #{ssim_loss.1} parent=1 // pred_check
      _
    $region31: #{ssim_loss.1} parent=1 // pred_check_branch
      %282 = sbr.rel (0) target = $region33
    $region32: #{ssim_loss.1} parent=1 // pred_region
      %284 = dma.done [#allocation4], 16
    $region33: #{ssim_loss.1} parent=1 // pred_fallthru
      _
    %285 = sfence
    %286 = vsyncpa [#allocation4], 1

</llo_original>
